<compile_context>
chip_gen: v6e
topology: v6e:2x2x1
jax: 0.10.0
libtpu: 0.0.40
codegen_flags: <defaults>
</compile_context>

<pallas_src>
import jax
import jax.numpy as jnp
import numpy as np
from jax.experimental import pallas as pl
from jax.experimental import pallas  # noqa: F401
from jax.experimental.pallas import tpu as pltpu  # noqa: F401  (kept for parity)

# ----------------------------- config (small) --------------------------------
IMAGE_SIZE = 16          # vision_config.image_size
PATCH_SIZE = 4           # vision_config.patch_size
CHANNELS = 3
PATCHES_PER_SIDE = IMAGE_SIZE // PATCH_SIZE          # 4
NUM_PATCHES = PATCHES_PER_SIDE * PATCHES_PER_SIDE    # 16
PATCH_DIM = CHANNELS * PATCH_SIZE * PATCH_SIZE       # 48
HV = 32                  # vision_config.hidden_size
HT = 64                  # text_config.hidden_size
MM_TOKENS_PER_IMAGE = 4  # config.mm_tokens_per_image
TOKENS_PER_SIDE = int(MM_TOKENS_PER_IMAGE ** 0.5)    # 2
POOL_K = PATCHES_PER_SIDE // TOKENS_PER_SIDE         # 2  (AvgPool2d kernel)
LAYER_NORM_EPS = 1e-6
VOCAB = 128
IMAGE_TOKEN_INDEX = 7
NUM_IMAGES = 2
SEQ_LEN = 16

# lane-padded dims (pad lane dims to 128, keep outputs lane-dense)
KPAD = 128     # PATCH_DIM 48 -> 128
HVPAD = 128    # HV        32 -> 128
HTPAD = 128    # HT        64 -> 128

MXU_DTYPE = jnp.bfloat16  # MXU operand dtype; accumulation / elementwise = f32


# ------------------------------ Pallas kernel ---------------------------------
def fused_mm_kernel(patches_ref, w_patch_ref, bias_pos_ref, pool_ref,
                    gamma_ref, w_mm_ref, sel_ref, txt_masked_ref,
                    img_ref, merged_ref):
    # patches_ref:    (B*NP, KPAD)    bf16  im2col'ed pixels, zero-padded K
    # w_patch_ref:    (KPAD, HVPAD)   bf16  Conv2d weight, zero-padded K & N
    # bias_pos_ref:   (B*NP, HVPAD)   f32   conv bias + position embedding
    # pool_ref:       (B*T2, B*NP)    f32   block-diagonal AvgPool2d matrix
    # gamma_ref:      (1, HVPAD)      f32   GemmaRMSNorm weight (zero-padded)
    # w_mm_ref:       (HVPAD, HTPAD)  bf16  mm_input_projection_weight
    # sel_ref:        (S, B*T2)       f32   masked one-hot image-row selector
    # txt_masked_ref: (S, HTPAD)      f32   text embeds, image positions zeroed
    # img_ref:        (B*T2, HTPAD)   f32   projected image embeddings (out)
    # merged_ref:     (S, HTPAD)      f32   merged input embeddings (out)

    # 1) patch embedding: all images in one MXU matmul, f32 accumulation.
    vis = jnp.dot(patches_ref[...], w_patch_ref[...],
                  preferred_element_type=jnp.float32) + bias_pos_ref[...]

    # 2) AvgPool2d over the patch grid, batched over images (block-diag matmul).
    pooled = jnp.dot(pool_ref[...], vis, preferred_element_type=jnp.float32)

    # 3) GemmaRMSNorm (f32). Padded lanes of `pooled` are exactly zero, so the
    #    lane-sum of squares divided by HV equals the mean over the HV valid
    #    lanes; padded gamma lanes are zero -> normed padded lanes stay zero.
    var = jnp.sum(pooled * pooled, axis=-1, keepdims=True) * (1.0 / HV)
    normed = pooled * jax.lax.rsqrt(var + LAYER_NORM_EPS)
    normed = normed * (1.0 + gamma_ref[...])

    # 4) projection to the text hidden size (bf16 operands, f32 accumulation).
    img = jnp.dot(normed.astype(w_mm_ref.dtype), w_mm_ref[...],
                  preferred_element_type=jnp.float32)
    img_ref[...] = img

    # 5) merge_multimodal_embeddings: one-hot scatter of image rows into the
    #    sequence + text embeddings whose image positions were pre-zeroed.
    merged_ref[...] = (jnp.dot(sel_ref[...], img,
                               preferred_element_type=jnp.float32)
                       + txt_masked_ref[...])


def run_fused(patches_pad, w_patch_pad, bias_pos_pad, pool_bd, gamma_pad,
              w_mm_pad, sel, txt_masked_pad):
    n_img_rows = pool_bd.shape[0]
    seq = sel.shape[0]
    return pl.pallas_call(
        fused_mm_kernel,
        out_shape=(jax.ShapeDtypeStruct((n_img_rows, HTPAD), jnp.float32),
                   jax.ShapeDtypeStruct((seq, HTPAD), jnp.float32)),
    )(patches_pad, w_patch_pad, bias_pos_pad, pool_bd, gamma_pad,
      w_mm_pad, sel, txt_masked_pad)


# ------------------------------ helpers ---------------------------------------
def build_pool_matrix():
    """AvgPool2d(kernel=POOL_K, stride=POOL_K) over a (P,P) patch grid as a
    (T2, NUM_PATCHES) averaging matrix."""
    P, T, k = PATCHES_PER_SIDE, TOKENS_PER_SIDE, POOL_K
    m = np.zeros((T * T, P * P), np.float32)
    for tr in range(T):
        for tc in range(T):
            t = tr * T + tc
            for dr in range(k):
                for dc in range(k):
                    p = (tr * k + dr) * P + (tc * k + dc)
                    m[t, p] = 1.0 / (k * k)
    return jnp.asarray(m)


def im2col(pixel_values):
    # (B, C, H, W) NCHW -> (B, NUM_PATCHES, C*p*p); patches row-major over the
    # (P, P) grid, feature order (C, ph, pw) matching PyTorch Conv2d weights.
    B = pixel_values.shape[0]
    x = pixel_values.reshape(B, CHANNELS, PATCHES_PER_SIDE, PATCH_SIZE,
                             PATCHES_PER_SIDE, PATCH_SIZE)
    x = x.transpose(0, 2, 4, 1, 3, 5)
    return x.reshape(B, NUM_PATCHES, PATCH_DIM)


def pad_last(x, target):
    return jnp.pad(x, [(0, 0)] * (x.ndim - 1) + [(0, target - x.shape[-1])])


# ------------------------------ forward ----------------------------------------
@jax.jit
def gemma3_mm_forward(input_ids, pixel_values, params):
    """Multimodal part of Gemma3ForConditionalGeneration.forward:
       vision features -> Gemma3MultiModalProjector -> merged input embeddings,
       all fused into a single Pallas kernel. The wrapper glue (im2col, padding,
       embedding gather, one-hot build) is jitted around it."""
    B = pixel_values.shape[0]

    # --- vision tower stand-in: im2col (wrapper glue; see TODO above) ---
    patches = im2col(pixel_values.astype(jnp.float32))
    patches_pad = pad_last(patches.reshape(B * NUM_PATCHES, PATCH_DIM),
                           KPAD).astype(MXU_DTYPE)

    # --- padded / bf16 parameters (zero padding is numerically free) ---
    w_patch_pad = pad_last(
        jnp.pad(params["w_patch"], ((0, KPAD - PATCH_DIM), (0, 0))),
        HVPAD).astype(MXU_DTYPE)
    bias_pos = params["pos_emb"] + params["b_patch"]               # (NP, HV)
    bias_pos_pad = pad_last(jnp.tile(bias_pos, (B, 1)), HVPAD)     # (B*NP, HVPAD)
    pool_bd = jnp.kron(jnp.eye(B, dtype=jnp.float32), params["pool_mat"])
    gamma_pad = pad_last(params["rms_gamma"], HVPAD)
    w_mm_pad = pad_last(
        jnp.pad(params["w_mm"], ((0, HVPAD - HV), (0, 0))),
        HTPAD).astype(MXU_DTYPE)

    # --- get_input_embeddings + merge bookkeeping (gather/index glue) ---
    txt_emb = jnp.take(params["embed_table"], input_ids, axis=0)   # (S, HT)
    mask = (input_ids == IMAGE_TOKEN_INDEX)
    n_img_rows = B * MM_TOKENS_PER_IMAGE
    idx = jnp.clip(jnp.cumsum(mask.astype(jnp.int32)) - 1, 0, n_img_rows - 1)
    sel = (mask.astype(jnp.float32)[:, None]
           * jax.nn.one_hot(idx, n_img_rows, dtype=jnp.float32))   # (S, B*T2)
    txt_masked_pad = pad_last(
        txt_emb * (1.0 - mask.astype(jnp.float32))[:, None], HTPAD)

    img_pad, merged_pad = run_fused(patches_pad, w_patch_pad, bias_pos_pad,
                                    pool_bd, gamma_pad, w_mm_pad, sel,
                                    txt_masked_pad)
    image_embeds = img_pad[:, :HT].reshape(B, MM_TOKENS_PER_IMAGE, HT)
    merged = merged_pad[:, :HT]
    return merged, image_embeds


# ------------------------------ reference (plain JAX) --------------------------
def reference(input_ids, pixel_values, params):
    patches = im2col(pixel_values.astype(jnp.float32))
    vis = jnp.einsum("bpd,dh->bph",
                     patches.astype(MXU_DTYPE),
                     params["w_patch"].astype(MXU_DTYPE),
                     preferred_element_type=jnp.float32)
    vis = vis + params["b_patch"] + params["pos_emb"]
    pooled = jnp.einsum("tp,bph->bth", params["pool_mat"], vis)
    var = jnp.mean(pooled * pooled, axis=-1, keepdims=True)
    normed = (pooled * jax.lax.rsqrt(var + LAYER_NORM_EPS)
              * (1.0 + params["rms_gamma"]))
    img = jnp.einsum("bth,hk->btk",
                     normed.astype(MXU_DTYPE),
                     params["w_mm"].astype(MXU_DTYPE),
                     preferred_element_type=jnp.float32)
    flat_img = img.reshape(-1, HT)
    txt = jnp.take(params["embed_table"], input_ids, axis=0)
    mask = (input_ids == IMAGE_TOKEN_INDEX)
    idx = jnp.clip(jnp.cumsum(mask.astype(jnp.int32)) - 1, 0,
                   flat_img.shape[0] - 1)
    merged = jnp.where(mask[:, None], jnp.take(flat_img, idx, axis=0), txt)
    return merged, img


# ---------------------------------- main ---------------------------------------
if __name__ == "__main__":
    key = jax.random.PRNGKey(0)
    k0, k1, k2, k3, k4, k5, k6, k7 = jax.random.split(key, 8)

    params = {
        "w_patch": jax.random.normal(k0, (PATCH_DIM, HV), jnp.float32) * 0.05,
        "b_patch": jax.random.normal(k1, (1, HV), jnp.float32) * 0.01,
        "pos_emb": jax.random.normal(k2, (NUM_PATCHES, HV), jnp.float32) * 0.02,
        "rms_gamma": jax.random.normal(k3, (1, HV), jnp.float32) * 0.1,
        "w_mm": jax.random.normal(k4, (HV, HT), jnp.float32) * 0.05,
        "embed_table": jax.random.normal(k5, (VOCAB, HT), jnp.float32) * 0.02,
        "pool_mat": build_pool_matrix(),
    }

    pixel_values = jax.random.normal(
        k6, (NUM_IMAGES, CHANNELS, IMAGE_SIZE, IMAGE_SIZE), jnp.float32)

    # sequence with 2 * mm_tokens_per_image image-placeholder tokens
    input_ids = jax.random.randint(k7, (SEQ_LEN,), 10, VOCAB, dtype=jnp.int32)
    img_positions = jnp.array([2, 3, 4, 5, 9, 10, 11, 12], dtype=jnp.int32)
    input_ids = input_ids.at[img_positions].set(IMAGE_TOKEN_INDEX)

    merged, image_embeds = gemma3_mm_forward(input_ids, pixel_values, params)
    jax.block_until_ready((merged, image_embeds))

    merged_ref, img_ref = reference(input_ids, pixel_values, params)
    # bf16 MXU inputs (same cast in both paths) + f32 accumulation.
    assert jnp.allclose(image_embeds, img_ref, atol=2e-3, rtol=2e-3)
    assert jnp.allclose(merged, merged_ref, atol=2e-3, rtol=2e-3)

    print("KERNEL_OK")
</pallas_src>

<mosaic_0001>
module attributes {stable_mosaic.version = 11 : i64} {
  func.func @fused_mm_kernel(%arg0: memref<32x128xbf16, #tpu.memory_space<vmem>>, %arg1: memref<128x128xbf16, #tpu.memory_space<vmem>>, %arg2: memref<32x128xf32, #tpu.memory_space<vmem>>, %arg3: memref<8x32xf32, #tpu.memory_space<vmem>>, %arg4: memref<1x128xf32, #tpu.memory_space<vmem>>, %arg5: memref<128x128xbf16, #tpu.memory_space<vmem>>, %arg6: memref<16x8xf32, #tpu.memory_space<vmem>>, %arg7: memref<16x128xf32, #tpu.memory_space<vmem>>, %arg8: memref<8x128xf32, #tpu.memory_space<vmem>>, %arg9: memref<16x128xf32, #tpu.memory_space<vmem>>) attributes {dimension_semantics = [], scalar_prefetch = 0 : i64, scratch_operands = 0 : i64, tpu.core_type = #tpu.core_type<tc>} {
    %c0 = arith.constant 0 : index
    %c0_0 = arith.constant 0 : index
    %0 = vector.load %arg0[%c0, %c0_0] : memref<32x128xbf16, #tpu.memory_space<vmem>>, vector<32x128xbf16>
    %c0_1 = arith.constant 0 : index
    %c0_2 = arith.constant 0 : index
    %1 = vector.load %arg1[%c0_1, %c0_2] : memref<128x128xbf16, #tpu.memory_space<vmem>>, vector<128x128xbf16>
    %cst = arith.constant dense<0.000000e+00> : vector<32x128xf32>
    %2 = tpu.matmul %0, %1, %cst {dimension_numbers = #tpu.dot_dimension_numbers<[1], [0], [0], [1], [0, 0, 1, 1], [], []>} : vector<32x128xbf16>, vector<128x128xbf16>, vector<32x128xf32> -> vector<32x128xf32>
    %c0_3 = arith.constant 0 : index
    %c0_4 = arith.constant 0 : index
    %3 = vector.load %arg2[%c0_3, %c0_4] : memref<32x128xf32, #tpu.memory_space<vmem>>, vector<32x128xf32>
    %4 = arith.addf %2, %3 : vector<32x128xf32>
    %c0_5 = arith.constant 0 : index
    %c0_6 = arith.constant 0 : index
    %5 = vector.load %arg3[%c0_5, %c0_6] : memref<8x32xf32, #tpu.memory_space<vmem>>, vector<8x32xf32>
    %cst_7 = arith.constant dense<0.000000e+00> : vector<8x128xf32>
    %6 = tpu.matmul %5, %4, %cst_7 {dimension_numbers = #tpu.dot_dimension_numbers<[1], [0], [0], [1], [0, 0, 1, 1], [], []>} : vector<8x32xf32>, vector<32x128xf32>, vector<8x128xf32> -> vector<8x128xf32>
    %7 = arith.mulf %6, %6 : vector<8x128xf32>
    %cst_8 = arith.constant dense<0.000000e+00> : vector<8xf32>
    %8 = vector.multi_reduction <add>, %7, %cst_8 [1] : vector<8x128xf32> to vector<8xf32>
    %9 = vector.shape_cast %8 : vector<8xf32> to vector<8x1xf32>
    %cst_9 = arith.constant 3.125000e-02 : f32
    %10 = vector.broadcast %cst_9 : f32 to vector<8x1xf32>
    %11 = arith.mulf %9, %10 : vector<8x1xf32>
    %cst_10 = arith.constant 9.99999997E-7 : f32
    %12 = vector.broadcast %cst_10 : f32 to vector<8x1xf32>
    %13 = arith.addf %11, %12 : vector<8x1xf32>
    %14 = math.rsqrt %13 : vector<8x1xf32>
    %15 = vector.broadcast %14 : vector<8x1xf32> to vector<8x128xf32>
    %16 = arith.mulf %6, %15 : vector<8x128xf32>
    %c0_11 = arith.constant 0 : index
    %c0_12 = arith.constant 0 : index
    %17 = vector.load %arg4[%c0_11, %c0_12] : memref<1x128xf32, #tpu.memory_space<vmem>>, vector<1x128xf32>
    %cst_13 = arith.constant 1.000000e+00 : f32
    %18 = vector.broadcast %cst_13 : f32 to vector<1x128xf32>
    %19 = arith.addf %18, %17 : vector<1x128xf32>
    %20 = vector.broadcast %19 : vector<1x128xf32> to vector<8x128xf32>
    %21 = arith.mulf %16, %20 : vector<8x128xf32>
    %22 = arith.truncf %21 : vector<8x128xf32> to vector<8x128xbf16>
    %c0_14 = arith.constant 0 : index
    %c0_15 = arith.constant 0 : index
    %23 = vector.load %arg5[%c0_14, %c0_15] : memref<128x128xbf16, #tpu.memory_space<vmem>>, vector<128x128xbf16>
    %cst_16 = arith.constant dense<0.000000e+00> : vector<8x128xf32>
    %24 = tpu.matmul %22, %23, %cst_16 {dimension_numbers = #tpu.dot_dimension_numbers<[1], [0], [0], [1], [0, 0, 1, 1], [], []>} : vector<8x128xbf16>, vector<128x128xbf16>, vector<8x128xf32> -> vector<8x128xf32>
    %c0_17 = arith.constant 0 : index
    %c0_18 = arith.constant 0 : index
    %25 = vector.load %arg8[%c0_17, %c0_18] : memref<8x128xf32, #tpu.memory_space<vmem>>, vector<8x128xf32>
    tpu.vector_store %arg8[%c0_17, %c0_18], %24 {strides = array<i32>} : memref<8x128xf32, #tpu.memory_space<vmem>>, vector<8x128xf32>,
    %c0_19 = arith.constant 0 : index
    %c0_20 = arith.constant 0 : index
    %26 = vector.load %arg6[%c0_19, %c0_20] : memref<16x8xf32, #tpu.memory_space<vmem>>, vector<16x8xf32>
    %cst_21 = arith.constant dense<0.000000e+00> : vector<16x128xf32>
    %27 = tpu.matmul %26, %24, %cst_21 {dimension_numbers = #tpu.dot_dimension_numbers<[1], [0], [0], [1], [0, 0, 1, 1], [], []>} : vector<16x8xf32>, vector<8x128xf32>, vector<16x128xf32> -> vector<16x128xf32>
    %c0_22 = arith.constant 0 : index
    %c0_23 = arith.constant 0 : index
    %28 = vector.load %arg7[%c0_22, %c0_23] : memref<16x128xf32, #tpu.memory_space<vmem>>, vector<16x128xf32>
    %29 = arith.addf %27, %28 : vector<16x128xf32>
    %c0_24 = arith.constant 0 : index
    %c0_25 = arith.constant 0 : index
    %30 = vector.load %arg9[%c0_24, %c0_25] : memref<16x128xf32, #tpu.memory_space<vmem>>, vector<16x128xf32>
    tpu.vector_store %arg9[%c0_24, %c0_25], %29 {strides = array<i32>} : memref<16x128xf32, #tpu.memory_space<vmem>>, vector<16x128xf32>,
    return
  }
}

</mosaic_0001>

<llo_original>
// kernel: gemma3_mm_forward.1
$region0: #{gemma3_mm_forward.1}
  #allocation0 [shape = 'u32[]', space=smem, size = 0x4, offset = 0x4, fixed_abs, tag = 'smem constant byte address 0x4 - core index']
  #allocation1 [shape = 'u32[144,128]{1,0:T(1,128)}', space=vmem, size = 0x12000, scoped, tag = 'internal scratch']
  %s0 = inlined_call_operand.vmem [shape: bf16[32,128], index: 0, kind: input, shape index: {}]
  %s1 = inlined_call_operand.vmem [shape: bf16[128,128], index: 1, kind: input, shape index: {}]
  %s2 = inlined_call_operand.vmem [shape: f32[32,128], index: 2, kind: input, shape index: {}]
  %s3 = inlined_call_operand.vmem [shape: f32[8,32], index: 3, kind: input, shape index: {}]
  %s4 = inlined_call_operand.vmem [shape: f32[1,128], index: 4, kind: input, shape index: {}]
  %s5 = inlined_call_operand.vmem [shape: bf16[128,128], index: 5, kind: input, shape index: {}]
  %s6 = inlined_call_operand.vmem [shape: f32[16,8], index: 6, kind: input, shape index: {}]
  %s7 = inlined_call_operand.vmem [shape: f32[16,128], index: 7, kind: input, shape index: {}]
  %s8 = inlined_call_operand.hbm [shape: f32[8,128], index: 8, kind: output, shape index: {0}]
  %s9 = inlined_call_operand.hbm [shape: f32[16,128], index: 9, kind: output, shape index: {1}]
  %10 = xla_tuple %s8, %s9
  %s11 = sld [smem:[#allocation0]]
  $region50: #{gemma3_mm_forward.1} parent=0
    _
  %s13 = ssub.s32 1, %s11
  %s14 = scalar_select 0, %s13, %s11
  $region1: #{gemma3_mm_forward.1} parent=0
    #allocation2 [shape = 'u8[4096]{0}', space=vmem, size = 0x1000, scoped, tag = 'output window, operand 0, single buffered']
    #allocation3 [shape = 's32[1]{0}', space=sflag, size = 0x4, scoped, tag = 'scoped memory for gemma3_mm_forward.1']
    #allocation4 [shape = 'u8[8192]{0}', space=vmem, size = 0x2000, scoped, tag = 'output window, operand 1, single buffered']
    #allocation5 [shape = 's32[1]{0}', space=sflag, size = 0x4, scoped, tag = 'scoped memory for gemma3_mm_forward.1']
    %15 = vsyncpa [#allocation3], 0
    %16 = vsyncpa [#allocation5], 0
    // Predicated region
    $region2: #{gemma3_mm_forward.1} parent=1 // pred_check
      _
    $region3: #{gemma3_mm_forward.1} parent=1 // pred_check_branch
      %18 = sbr.rel (0) target = $region5
    $region4: #{gemma3_mm_forward.1} parent=1 // pred_region
      _
    $region5: #{gemma3_mm_forward.1} parent=1 // pred_fallthru
      _
    // Predicated region
    $region6: #{gemma3_mm_forward.1} parent=1 // pred_check
      _
    $region7: #{gemma3_mm_forward.1} parent=1 // pred_check_branch
      %20 = sbr.rel (0) target = $region9
    $region8: #{gemma3_mm_forward.1} parent=1 // pred_region
      _
    $region9: #{gemma3_mm_forward.1} parent=1 // pred_fallthru
      _
    // Predicated region
    $region10: #{gemma3_mm_forward.1} parent=1 // pred_check
      _
    $region11: #{gemma3_mm_forward.1} parent=1 // pred_check_branch
      %22 = sbr.rel (0) target = $region13
    $region12: #{gemma3_mm_forward.1} parent=1 // pred_region
      _
    $region13: #{gemma3_mm_forward.1} parent=1 // pred_fallthru
      _
    // Predicated region
    $region14: #{gemma3_mm_forward.1} parent=1 // pred_check
      _
    $region15: #{gemma3_mm_forward.1} parent=1 // pred_check_branch
      %24 = sbr.rel (0) target = $region17
    $region16: #{gemma3_mm_forward.1} parent=1 // pred_region
      _
    $region17: #{gemma3_mm_forward.1} parent=1 // pred_fallthru
      _
    // Predicated region
    $region18: #{gemma3_mm_forward.1} parent=1 // pred_check
      _
    $region19: #{gemma3_mm_forward.1} parent=1 // pred_check_branch
      %26 = sbr.rel (0) target = $region21
    $region20: #{gemma3_mm_forward.1} parent=1 // pred_region
      _
    $region21: #{gemma3_mm_forward.1} parent=1 // pred_fallthru
      _
    // Predicated region
    $region22: #{gemma3_mm_forward.1} parent=1 // pred_check
      _
    $region23: #{gemma3_mm_forward.1} parent=1 // pred_check_branch
      %28 = sbr.rel (0) target = $region25
    $region24: #{gemma3_mm_forward.1} parent=1 // pred_region
      _
    $region25: #{gemma3_mm_forward.1} parent=1 // pred_fallthru
      _
    // Predicated region
    $region26: #{gemma3_mm_forward.1} parent=1 // pred_check
      _
    $region27: #{gemma3_mm_forward.1} parent=1 // pred_check_branch
      %30 = sbr.rel (0) target = $region29
    $region28: #{gemma3_mm_forward.1} parent=1 // pred_region
      _
    $region29: #{gemma3_mm_forward.1} parent=1 // pred_fallthru
      _
    // Predicated region
    $region30: #{gemma3_mm_forward.1} parent=1 // pred_check
      _
    $region31: #{gemma3_mm_forward.1} parent=1 // pred_check_branch
      %32 = sbr.rel (0) target = $region33
    $region32: #{gemma3_mm_forward.1} parent=1 // pred_region
      _
    $region33: #{gemma3_mm_forward.1} parent=1 // pred_fallthru
      _
    %v34 = vld [vmem:[%s0] sm:$0xf]
    %v35 = vld [vmem:[%s0 + $0x4] sm:$0xf]
    %v36 = vld [vmem:[%s0 + $0x8] sm:$0xf]
    %v37 = vld [vmem:[%s0 + $0xc] sm:$0xf]
    %v38 = vld [vmem:[%s1] sm:$0xf]
    %v39 = vld [vmem:[%s1 + $0x4] sm:$0xf]
    %v40 = vld [vmem:[%s1 + $0x8] sm:$0xf]
    %v41 = vld [vmem:[%s1 + $0xc] sm:$0xf]
    %v42 = vld [vmem:[%s1 + $0x10] sm:$0xf]
    %v43 = vld [vmem:[%s1 + $0x14] sm:$0xf]
    %v44 = vld [vmem:[%s1 + $0x18] sm:$0xf]
    %v45 = vld [vmem:[%s1 + $0x1c] sm:$0xf]
    %v46 = vld [vmem:[%s1 + $0x20] sm:$0xf]
    %v47 = vld [vmem:[%s1 + $0x24] sm:$0xf]
    %v48 = vld [vmem:[%s1 + $0x28] sm:$0xf]
    %v49 = vld [vmem:[%s1 + $0x2c] sm:$0xf]
    %v50 = vld [vmem:[%s1 + $0x30] sm:$0xf]
    %v51 = vld [vmem:[%s1 + $0x34] sm:$0xf]
    %v52 = vld [vmem:[%s1 + $0x38] sm:$0xf]
    %v53 = vld [vmem:[%s1 + $0x3c] sm:$0xf]
    %v54 = vld [vmem:[%s2] sm:$0xff]
    %v55 = vld [vmem:[%s2 + $0x8] sm:$0xff]
    %v56 = vld [vmem:[%s2 + $0x10] sm:$0xff]
    %v57 = vld [vmem:[%s2 + $0x18] sm:$0xff]
    %v62 = vunpack.c.l.b16 %v34
    %v63 = vunpack.c.l.b16 %v35
    %v64 = vunpack.c.l.b16 %v36
    %v65 = vunpack.c.l.b16 %v37
    %v66 = vpack.c.b16 %v63, %v62
    %v67 = vpack.c.b16 %v65, %v64
    %v86 = vunpack.c.l.b16 %v38
    %v87 = vunpack.c.l.b16 %v39
    %v88 = vunpack.c.l.b16 %v40
    %v89 = vunpack.c.l.b16 %v41
    %v90 = vunpack.c.l.b16 %v42
    %v91 = vunpack.c.l.b16 %v43
    %v92 = vunpack.c.l.b16 %v44
    %v93 = vunpack.c.l.b16 %v45
    %v94 = vunpack.c.l.b16 %v46
    %v95 = vunpack.c.l.b16 %v47
    %v96 = vunpack.c.l.b16 %v48
    %v97 = vunpack.c.l.b16 %v49
    %v98 = vunpack.c.l.b16 %v50
    %v99 = vunpack.c.l.b16 %v51
    %v100 = vunpack.c.l.b16 %v52
    %v101 = vunpack.c.l.b16 %v53
    %v102 = vpack.c.b16 %v87, %v86
    %v103 = vpack.c.b16 %v89, %v88
    %v104 = vpack.c.b16 %v91, %v90
    %v105 = vpack.c.b16 %v93, %v92
    %v106 = vpack.c.b16 %v95, %v94
    %v107 = vpack.c.b16 %v97, %v96
    %v108 = vpack.c.b16 %v99, %v98
    %v109 = vpack.c.b16 %v101, %v100
    %118 = vmatprep.subr.bf16.mxu0 0
    %119 = vmatpush1.bf16.msra.mxu0 %v109
    %120 = vmatprep.subr.bf16.mxu0 0
    %121 = vmatpush1.bf16.msra.mxu0 %v108
    %122 = vmatprep.subr.bf16.mxu0 0
    %123 = vmatpush1.bf16.msra.mxu0 %v107
    %124 = vmatprep.subr.bf16.mxu0 0
    %125 = vmatpush1.bf16.msra.mxu0 %v106
    %126 = vmatprep.subr.bf16.mxu0 0
    %127 = vmatpush1.bf16.msra.mxu0 %v105
    %128 = vmatprep.subr.bf16.mxu0 0
    %129 = vmatpush1.bf16.msra.mxu0 %v104
    %130 = vmatprep.subr.bf16.mxu0 0
    %131 = vmatpush1.bf16.msra.mxu0 %v103
    %132 = vmatprep.subr.bf16.mxu0 0
    %133 = vmatpush1.bf16.msra.mxu0 %v102
    %134 = vmatprep.subr.bf16.mxu0 0
    %135 = vmatpush2.bf16.msra.mxu0 0
    %136 = vmatprep.subr.bf16.mxu0 0
    %137 = vmatpush2.bf16.msra.mxu0 0
    %138 = vmatprep.subr.bf16.mxu0 0
    %139 = vmatpush2.bf16.msra.mxu0 0
    %140 = vmatprep.subr.bf16.mxu0 0
    %141 = vmatpush2.bf16.msra.mxu0 0
    %142 = vmatprep.subr.bf16.mxu0 0
    %143 = vmatpush2.bf16.msra.mxu0 0
    %144 = vmatprep.subr.bf16.mxu0 0
    %145 = vmatpush2.bf16.msra.mxu0 0
    %146 = vmatprep.subr.bf16.mxu0 0
    %147 = vmatpush2.bf16.msra.mxu0 0
    %148 = vmatprep.subr.bf16.mxu0 0
    %149 = vmatpush2.bf16.msra.mxu0 0
    %150 = vmatprep.mubr.bf16.mxu0 0
    %151 = vmatmul.mubr.bf16.gmra.mxu0 %v66
    %v152 = vpop.f32.mrf.mxu0
    %v153 = vadd.f32 %v54, %v152
    %v154 = vpop.f32.mrf.mxu0
    %v155 = vpop.f32.mrf.mxu0
    %v156 = vadd.f32 %v55, %v155
    %v157 = vpop.f32.mrf.mxu0
    %158 = vmatprep.mubr.bf16.mxu0 0
    %159 = vmatmul.mubr.bf16.gmra.mxu0 %v67
    %v160 = vpop.f32.mrf.mxu0
    %v161 = vadd.f32 %v56, %v160
    %v162 = vpop.f32.mrf.mxu0
    %v163 = vpop.f32.mrf.mxu0
    %v164 = vadd.f32 %v57, %v163
    %v165 = vpop.f32.mrf.mxu0
    %166 = vdwg.mxu0
    %v167 = vld [vmem:[%s3] sm:$0xff]
    %vm168 = vcmask 261120
    %v170 = vsel %vm168, %v167, 0
    %172 = vmatprep.subr.mxu0 0.0
    %173 = vmatpush1.msra.mxu0 0.0
    %174 = vmatprep.subr.mxu0 0.0
    %175 = vmatpush1.msra.mxu0 0.0
    %176 = vmatprep.subr.mxu0 0.0
    %177 = vmatpush1.msra.mxu0 0.0
    %178 = vmatprep.subr.mxu0 0.0
    %179 = vmatpush1.msra.mxu0 0.0
    %180 = vmatprep.subr.mxu0 0.0
    %181 = vmatpush1.msra.mxu0 0.0
    %182 = vmatprep.subr.mxu0 0.0
    %183 = vmatpush1.msra.mxu0 0.0
    %184 = vmatprep.subr.mxu0 0.0
    %185 = vmatpush1.msra.mxu0 0.0
    %186 = vmatprep.subr.mxu0 0.0
    %187 = vmatpush1.msra.mxu0 0.0
    %188 = vmatprep.subr.mxu0 0.0
    %189 = vmatpush1.msra.mxu0 0.0
    %190 = vmatprep.subr.mxu0 0.0
    %191 = vmatpush1.msra.mxu0 0.0
    %192 = vmatprep.subr.mxu0 0.0
    %193 = vmatpush1.msra.mxu0 0.0
    %194 = vmatprep.subr.mxu0 0.0
    %195 = vmatpush1.msra.mxu0 0.0
    %196 = vmatprep.subr.mxu0 0.0
    %197 = vmatpush1.msra.mxu0 %v164
    %198 = vmatprep.subr.mxu0 0.0
    %199 = vmatpush1.msra.mxu0 %v161
    %200 = vmatprep.subr.mxu0 0.0
    %201 = vmatpush1.msra.mxu0 %v156
    %202 = vmatprep.subr.mxu0 0.0
    %203 = vmatpush1.msra.mxu0 %v153
    %204 = vmatprep.subr.mxu0 0.0
    %205 = vmatpush2.msra.mxu0 0.0
    %206 = vmatprep.subr.mxu0 0.0
    %207 = vmatpush2.msra.mxu0 0.0
    %208 = vmatprep.subr.mxu0 0.0
    %209 = vmatpush2.msra.mxu0 0.0
    %210 = vmatprep.subr.mxu0 0.0
    %211 = vmatpush2.msra.mxu0 0.0
    %212 = vmatprep.subr.mxu0 0.0
    %213 = vmatpush2.msra.mxu0 0.0
    %214 = vmatprep.subr.mxu0 0.0
    %215 = vmatpush2.msra.mxu0 0.0
    %216 = vmatprep.subr.mxu0 0.0
    %217 = vmatpush2.msra.mxu0 0.0
    %218 = vmatprep.subr.mxu0 0.0
    %219 = vmatpush2.msra.mxu0 0.0
    %220 = vmatprep.subr.mxu0 0.0
    %221 = vmatpush2.msra.mxu0 0.0
    %222 = vmatprep.subr.mxu0 0.0
    %223 = vmatpush2.msra.mxu0 0.0
    %224 = vmatprep.subr.mxu0 0.0
    %225 = vmatpush2.msra.mxu0 0.0
    %226 = vmatprep.subr.mxu0 0.0
    %227 = vmatpush2.msra.mxu0 0.0
    %228 = vmatprep.subr.mxu0 0.0
    %229 = vmatpush2.msra.mxu0 0.0
    %230 = vmatprep.subr.mxu0 0.0
    %231 = vmatpush2.msra.mxu0 0.0
    %232 = vmatprep.subr.mxu0 0.0
    %233 = vmatpush2.msra.mxu0 0.0
    %234 = vmatprep.subr.mxu0 0.0
    %235 = vmatpush2.msra.mxu0 0.0
    %236 = vmatprep.mubr.f32.mxu0 0.0
    %237 = vmatmul.mubr.f32.gmra.mxu0 %v170
    %v238 = vpop.f32.mrf.mxu0
    %v239 = vadd.f32 0.0, %v238
    %v240 = vpop.f32.mrf.mxu0
    %241 = vdwg.mxu0
    %v242 = vmul.f32 %v239, %v239
    %243 = vadd.xlane.f32.xlu0 %v242
    %v244 = vpop.xlane.xlu0 %243
    %v245 = vmul.f32 %v244, 0.03125
    %v246 = vadd.f32 %v245, 1e-06
    %v247 = vrsqrt.pop %v246
    %v248 = vmul.f32 %v239, %v247
    %v249 = vld [vmem:[%s4] sm:$0x1]
    %v250 = vadd.f32 %v249, 1.0
    %v252 = vlaneseq
    %v253 = vshrl.u32 %v252, 7
    %v254 = vsub.s32 0, %v253
    %v255 = vrot.slane %v250, %v254
    %v257 = vmul.f32 %v248, %v255
    %v258 = vpack.c.bf16 %v257, %v257
    %v259 = vld [vmem:[%s5] sm:$0xf]
    %v260 = vld [vmem:[%s5 + $0x4] sm:$0xf]
    %v261 = vld [vmem:[%s5 + $0x8] sm:$0xf]
    %v262 = vld [vmem:[%s5 + $0xc] sm:$0xf]
    %v263 = vld [vmem:[%s5 + $0x10] sm:$0xf]
    %v264 = vld [vmem:[%s5 + $0x14] sm:$0xf]
    %v265 = vld [vmem:[%s5 + $0x18] sm:$0xf]
    %v266 = vld [vmem:[%s5 + $0x1c] sm:$0xf]
    %v267 = vld [vmem:[%s5 + $0x20] sm:$0xf]
    %v268 = vld [vmem:[%s5 + $0x24] sm:$0xf]
    %v269 = vld [vmem:[%s5 + $0x28] sm:$0xf]
    %v270 = vld [vmem:[%s5 + $0x2c] sm:$0xf]
    %v271 = vld [vmem:[%s5 + $0x30] sm:$0xf]
    %v272 = vld [vmem:[%s5 + $0x34] sm:$0xf]
    %v273 = vld [vmem:[%s5 + $0x38] sm:$0xf]
    %v274 = vld [vmem:[%s5 + $0x3c] sm:$0xf]
    %v291 = vunpack.c.l.b16 %v259
    %v292 = vunpack.c.l.b16 %v260
    %v293 = vunpack.c.l.b16 %v261
    %v294 = vunpack.c.l.b16 %v262
    %v295 = vunpack.c.l.b16 %v263
    %v296 = vunpack.c.l.b16 %v264
    %v297 = vunpack.c.l.b16 %v265
    %v298 = vunpack.c.l.b16 %v266
    %v299 = vunpack.c.l.b16 %v267
    %v300 = vunpack.c.l.b16 %v268
    %v301 = vunpack.c.l.b16 %v269
    %v302 = vunpack.c.l.b16 %v270
    %v303 = vunpack.c.l.b16 %v271
    %v304 = vunpack.c.l.b16 %v272
    %v305 = vunpack.c.l.b16 %v273
    %v306 = vunpack.c.l.b16 %v274
    %v307 = vpack.c.b16 %v292, %v291
    %v308 = vpack.c.b16 %v294, %v293
    %v309 = vpack.c.b16 %v296, %v295
    %v310 = vpack.c.b16 %v298, %v297
    %v311 = vpack.c.b16 %v300, %v299
    %v312 = vpack.c.b16 %v302, %v301
    %v313 = vpack.c.b16 %v304, %v303
    %v314 = vpack.c.b16 %v306, %v305
    %323 = vmatprep.subr.bf16.mxu0 0
    %324 = vmatpush1.bf16.msra.mxu0 %v314
    %325 = vmatprep.subr.bf16.mxu0 0
    %326 = vmatpush1.bf16.msra.mxu0 %v313
    %327 = vmatprep.subr.bf16.mxu0 0
    %328 = vmatpush1.bf16.msra.mxu0 %v312
    %329 = vmatprep.subr.bf16.mxu0 0
    %330 = vmatpush1.bf16.msra.mxu0 %v311
    %331 = vmatprep.subr.bf16.mxu0 0
    %332 = vmatpush1.bf16.msra.mxu0 %v310
    %333 = vmatprep.subr.bf16.mxu0 0
    %334 = vmatpush1.bf16.msra.mxu0 %v309
    %335 = vmatprep.subr.bf16.mxu0 0
    %336 = vmatpush1.bf16.msra.mxu0 %v308
    %337 = vmatprep.subr.bf16.mxu0 0
    %338 = vmatpush1.bf16.msra.mxu0 %v307
    %339 = vmatprep.subr.bf16.mxu0 0
    %340 = vmatpush2.bf16.msra.mxu0 0
    %341 = vmatprep.subr.bf16.mxu0 0
    %342 = vmatpush2.bf16.msra.mxu0 0
    %343 = vmatprep.subr.bf16.mxu0 0
    %344 = vmatpush2.bf16.msra.mxu0 0
    %345 = vmatprep.subr.bf16.mxu0 0
    %346 = vmatpush2.bf16.msra.mxu0 0
    %347 = vmatprep.subr.bf16.mxu0 0
    %348 = vmatpush2.bf16.msra.mxu0 0
    %349 = vmatprep.subr.bf16.mxu0 0
    %350 = vmatpush2.bf16.msra.mxu0 0
    %351 = vmatprep.subr.bf16.mxu0 0
    %352 = vmatpush2.bf16.msra.mxu0 0
    %353 = vmatprep.subr.bf16.mxu0 0
    %354 = vmatpush2.bf16.msra.mxu0 0
    %355 = vmatprep.mubr.bf16.mxu0 0
    %356 = vmatmul.mubr.bf16.gmra.mxu0 %v258
    %v357 = vpop.f32.mrf.mxu0
    %v358 = vadd.f32 0.0, %v357
    %v359 = vpop.f32.mrf.mxu0
    %v360 = vpop.f32.mrf.mxu0
    %v361 = vpop.f32.mrf.mxu0
    %362 = vdwg.mxu0
    %363 = vst [vmem:[#allocation2] sm:$0xff] %v358
    %v364 = vld [vmem:[%s6] sm:$0xff]
    %v365 = vld [vmem:[%s6 + $0x8] sm:$0xff]
    %v366 = vld [vmem:[%s7] sm:$0xff]
    %v367 = vld [vmem:[%s7 + $0x8] sm:$0xff]
    %vm368 = vcmask 64512
    %v370 = vsel %vm368, %v364, 0
    %v373 = vsel %vm368, %v365, 0
    %375 = vmatprep.subr.mxu0 0.0
    %376 = vmatpush1.msra.mxu0 0.0
    %377 = vmatprep.subr.mxu0 0.0
    %378 = vmatpush1.msra.mxu0 0.0
    %379 = vmatprep.subr.mxu0 0.0
    %380 = vmatpush1.msra.mxu0 0.0
    %381 = vmatprep.subr.mxu0 0.0
    %382 = vmatpush1.msra.mxu0 0.0
    %383 = vmatprep.subr.mxu0 0.0
    %384 = vmatpush1.msra.mxu0 0.0
    %385 = vmatprep.subr.mxu0 0.0
    %386 = vmatpush1.msra.mxu0 0.0
    %387 = vmatprep.subr.mxu0 0.0
    %388 = vmatpush1.msra.mxu0 0.0
    %389 = vmatprep.subr.mxu0 0.0
    %390 = vmatpush1.msra.mxu0 0.0
    %391 = vmatprep.subr.mxu0 0.0
    %392 = vmatpush1.msra.mxu0 0.0
    %393 = vmatprep.subr.mxu0 0.0
    %394 = vmatpush1.msra.mxu0 0.0
    %395 = vmatprep.subr.mxu0 0.0
    %396 = vmatpush1.msra.mxu0 0.0
    %397 = vmatprep.subr.mxu0 0.0
    %398 = vmatpush1.msra.mxu0 0.0
    %399 = vmatprep.subr.mxu0 0.0
    %400 = vmatpush1.msra.mxu0 0.0
    %401 = vmatprep.subr.mxu0 0.0
    %402 = vmatpush1.msra.mxu0 0.0
    %403 = vmatprep.subr.mxu0 0.0
    %404 = vmatpush1.msra.mxu0 0.0
    %405 = vmatprep.subr.mxu0 0.0
    %406 = vmatpush1.msra.mxu0 %v358
    %407 = vmatprep.subr.mxu0 0.0
    %408 = vmatpush2.msra.mxu0 0.0
    %409 = vmatprep.subr.mxu0 0.0
    %410 = vmatpush2.msra.mxu0 0.0
    %411 = vmatprep.subr.mxu0 0.0
    %412 = vmatpush2.msra.mxu0 0.0
    %413 = vmatprep.subr.mxu0 0.0
    %414 = vmatpush2.msra.mxu0 0.0
    %415 = vmatprep.subr.mxu0 0.0
    %416 = vmatpush2.msra.mxu0 0.0
    %417 = vmatprep.subr.mxu0 0.0
    %418 = vmatpush2.msra.mxu0 0.0
    %419 = vmatprep.subr.mxu0 0.0
    %420 = vmatpush2.msra.mxu0 0.0
    %421 = vmatprep.subr.mxu0 0.0
    %422 = vmatpush2.msra.mxu0 0.0
    %423 = vmatprep.subr.mxu0 0.0
    %424 = vmatpush2.msra.mxu0 0.0
    %425 = vmatprep.subr.mxu0 0.0
    %426 = vmatpush2.msra.mxu0 0.0
    %427 = vmatprep.subr.mxu0 0.0
    %428 = vmatpush2.msra.mxu0 0.0
    %429 = vmatprep.subr.mxu0 0.0
    %430 = vmatpush2.msra.mxu0 0.0
    %431 = vmatprep.subr.mxu0 0.0
    %432 = vmatpush2.msra.mxu0 0.0
    %433 = vmatprep.subr.mxu0 0.0
    %434 = vmatpush2.msra.mxu0 0.0
    %435 = vmatprep.subr.mxu0 0.0
    %436 = vmatpush2.msra.mxu0 0.0
    %437 = vmatprep.subr.mxu0 0.0
    %438 = vmatpush2.msra.mxu0 0.0
    %439 = vmatprep.mubr.f32.mxu0 0.0
    %440 = vmatmul.mubr.f32.gmra.mxu0 %v370
    %v441 = vpop.f32.mrf.mxu0
    %v442 = vadd.f32 %v366, %v441
    %v443 = vpop.f32.mrf.mxu0
    %444 = vmatprep.mubr.f32.mxu0 0.0
    %445 = vmatmul.mubr.f32.gmra.mxu0 %v373
    %v446 = vpop.f32.mrf.mxu0
    %v447 = vadd.f32 %v367, %v446
    %v448 = vpop.f32.mrf.mxu0
    %449 = vdwg.mxu0
    %450 = vst [vmem:[#allocation4] sm:$0xff] %v442
    %451 = vst [vmem:[#allocation4 + $0x8] sm:$0xff] %v447
    // Predicated region
    $region34: #{gemma3_mm_forward.1} parent=1 // pred_check
      _
    $region35: #{gemma3_mm_forward.1} parent=1 // pred_check_branch
      %453 = sbr.rel (0) target = $region37
    $region36: #{gemma3_mm_forward.1} parent=1 // pred_region
      %s455 = ssub.s32 128, 128
      %456 = vsyncadd [#allocation3], %s455
      %s458 = sshll.u32 [#allocation2], 4
      %s459 = int_to_ptr.vmem [resolvable:$true] %s458
      %461 = dma.vmem_to_hbm [thread:$0]  %s459, 128, %s8, [#allocation3]
    $region37: #{gemma3_mm_forward.1} parent=1 // pred_fallthru
      _
    // Predicated region
    $region38: #{gemma3_mm_forward.1} parent=1 // pred_check
      _
    $region39: #{gemma3_mm_forward.1} parent=1 // pred_check_branch
      %463 = sbr.rel (0) target = $region41
    $region40: #{gemma3_mm_forward.1} parent=1 // pred_region
      %s465 = ssub.s32 256, 256
      %466 = vsyncadd [#allocation5], %s465
      %s467 = sshll.u32 [#allocation4], 4
      %s468 = int_to_ptr.vmem [resolvable:$true] %s467
      %473 = dma.vmem_to_hbm [thread:$0]  %s468, 256, %s9, [#allocation5], 128, 128, 8
    $region41: #{gemma3_mm_forward.1} parent=1 // pred_fallthru
      _
    // Predicated region
    $region42: #{gemma3_mm_forward.1} parent=1 // pred_check
      _
    $region43: #{gemma3_mm_forward.1} parent=1 // pred_check_branch
      %475 = sbr.rel (0) target = $region45
    $region44: #{gemma3_mm_forward.1} parent=1 // pred_region
      %476 = dma.done [#allocation3], 128
    $region45: #{gemma3_mm_forward.1} parent=1 // pred_fallthru
      _
    // Predicated region
    $region46: #{gemma3_mm_forward.1} parent=1 // pred_check
      _
    $region47: #{gemma3_mm_forward.1} parent=1 // pred_check_branch
      %478 = sbr.rel (0) target = $region49
    $region48: #{gemma3_mm_forward.1} parent=1 // pred_region
      %479 = dma.done [#allocation5], 256
    $region49: #{gemma3_mm_forward.1} parent=1 // pred_fallthru
      _
    %480 = vsyncpa [#allocation3], 1
    %481 = vsyncpa [#allocation5], 1

</llo_original>
